<compile_context>
chip_gen: v7x
topology: tpu7x:2x2x1
jax: 0.10.0
libtpu: 0.0.40
codegen_flags: <defaults>
</compile_context>

<pallas_src>
import functools

import jax
import jax.numpy as jnp
from jax import lax
from jax.experimental import pallas as pl
from jax.experimental.pallas import tpu as pltpu

BN_EPS = 1e-5


def dense_layer_kernel(x_ref, g1_ref, be1_ref, w1_ref,
                       g2_ref, be2_ref, w2_ref, cb2_ref, o_ref,
                       *, H, W, roll_like_numpy):
    """Fused DenseLayer forward (training-mode batch statistics).

    x_ref : (N, Cin, H*W) f32   input, NCHW with spatial flattened (lane-dense)
    g1/be1: (Cin, 1)      f32   BN1 gamma/beta
    w1    : (C4, Cin)     bf16  1x1 conv weight (out, in)
    g2/be2: (C4, 1)       f32   BN2 gamma/beta
    w2    : (G, 9*C4)     bf16  3x3 conv weight, columns ordered (ky, kx, c)
    cb2   : (G, 1)        f32   conv2 bias
    o_ref : (N, G, H*W)   f32   output, NCHW with spatial flattened (lane-dense)
    """
    N, Cin, HW = x_ref.shape
    C4 = w1_ref.shape[0]
    NHW = N * HW
    inv_nhw = 1.0 / float(NHW)

    # ---- BN1: two-pass training-mode batch stats over (N, H*W) ------------------
    s1 = jnp.sum(x_ref[0], axis=1, keepdims=True)
    for n in range(1, N):
        s1 = s1 + jnp.sum(x_ref[n], axis=1, keepdims=True)
    mu1 = s1 * inv_nhw                                            # (Cin, 1)
    v1 = None
    for n in range(N):
        d = x_ref[n] - mu1
        p = jnp.sum(d * d, axis=1, keepdims=True)
        v1 = p if v1 is None else v1 + p
    var1 = v1 * inv_nhw
    scale1 = g1_ref[...] * lax.rsqrt(var1 + BN_EPS)
    bias1 = be1_ref[...] - mu1 * scale1

    # ---- conv1 (1x1) per image: bf16 MXU matmul, f32 accumulate ------------------
    # conv1 bias is dropped: a per-channel constant added before training-mode BN2
    # is exactly cancelled by the mean subtraction (mathematical no-op).
    w1b = w1_ref[...]                                             # (C4, Cin) bf16
    hs = []
    s2 = None
    for n in range(N):
        xh = jnp.maximum(x_ref[n] * scale1 + bias1, 0.0)          # (Cin, HW) f32
        h = jnp.dot(w1b, xh.astype(jnp.bfloat16),
                    preferred_element_type=jnp.float32)           # (C4, HW) f32
        hs.append(h)
        p = jnp.sum(h, axis=1, keepdims=True)
        s2 = p if s2 is None else s2 + p

    # ---- BN2: two-pass stats on conv1 output -------------------------------------
    mu2 = s2 * inv_nhw                                            # (C4, 1)
    v2 = None
    for n in range(N):
        d = hs[n] - mu2
        p = jnp.sum(d * d, axis=1, keepdims=True)
        v2 = p if v2 is None else v2 + p
    var2 = v2 * inv_nhw
    scale2 = g2_ref[...] * lax.rsqrt(var2 + BN_EPS)
    bias2 = be2_ref[...] - mu2 * scale2

    # ---- conv2 (3x3, pad=1): 9 masked lane rolls -> one K=9*C4 matmul per image --
    # Precompute the boundary masks ONCE; reused across the 8 taps and all images.
    lane = lax.broadcasted_iota(jnp.int32, (1, HW), 1)
    col = lane % W
    row = lane // W
    row_ok = {-1: row >= 1, 0: None, 1: row <= (H - 2)}
    col_ok = {-1: col >= 1, 0: None, 1: col <= (W - 2)}
    tap_masks = []
    for dy in (-1, 0, 1):
        for dx in (-1, 0, 1):
            mr, mc = row_ok[dy], col_ok[dx]
            if mr is None:
                tap_masks.append(mc)
            elif mc is None:
                tap_masks.append(mr)
            else:
                tap_masks.append(mr & mc)

    w2b = w2_ref[...]                                             # (G, 9*C4) bf16
    cb2 = cb2_ref[...]                                            # (G, 1)    f32
    for n in range(N):
        hh = jnp.maximum(hs[n] * scale2 + bias2, 0.0)             # (C4, HW) f32
        taps = []
        t_idx = 0
        for dy in (-1, 0, 1):
            for dx in (-1, 0, 1):
                off = dy * W + dx
                if off == 0:
                    t = hh
                else:
                    # want tap[s] = hh[s + off]  (== np.roll(hh, -off) along lanes)
                    shift = (-off) % HW if roll_like_numpy else off % HW
                    t = pltpu.roll(hh, shift, axis=1)
                m = tap_masks[t_idx]
                if m is not None:
                    t = jnp.where(m, t, 0.0)
                taps.append(t.astype(jnp.bfloat16))               # bf16 matmul input
                t_idx += 1
        im2col = jnp.concatenate(taps, axis=0)                    # (9*C4, HW) bf16
        out2d = jnp.dot(w2b, im2col,
                        preferred_element_type=jnp.float32) + cb2  # (G, HW) f32
        o_ref[n] = out2d.astype(o_ref.dtype)                      # lane-dense store


def _pltpu_roll_matches_numpy():
    """One-time, same-process probe of pltpu.roll's sign convention (no probe/deploy
    skew possible here since the probe and the kernel share the same JAX/libtpu)."""
    def k(x_ref, o_ref):
        o_ref[...] = pltpu.roll(x_ref[...], 1, axis=1)

    x = jnp.arange(8 * 128, dtype=jnp.float32).reshape(8, 128)
    y = pl.pallas_call(k, out_shape=jax.ShapeDtypeStruct((8, 128), jnp.float32))(x)
    return bool(jnp.array_equal(y, jnp.roll(x, 1, axis=1)))


@functools.partial(jax.jit, static_argnames=("roll_like_numpy",))
def dense_layer_forward(x_nchw, g1, be1, w1, cb1, g2, be2, w2, cb2,
                        *, roll_like_numpy=True):
    """x_nchw: (N, Cin, H, W) f32.  Params in PyTorch shapes (OIHW / per-channel).
    Returns (N, G, H, W) f32."""
    N, Cin, H, W = x_nchw.shape
    C4 = w1.shape[0]          # conv1.weight: (C4, Cin, 1, 1)
    G = w2.shape[0]           # conv2.weight: (G, C4, 3, 3)
    HW = H * W

    # Free reshapes only -- no NCHW<->NHWC transposes, no extra HBM passes on x.
    x_r = x_nchw.reshape(N, Cin, HW)
    g1c, be1c = g1.reshape(Cin, 1), be1.reshape(Cin, 1)
    w1b = w1.reshape(C4, Cin).astype(jnp.bfloat16)            # bf16 MXU operand
    g2c, be2c = g2.reshape(C4, 1), be2.reshape(C4, 1)
    # im2col rows are ordered (ky, kx, c) -> weight columns must match; bf16 operand.
    w2b = jnp.transpose(w2, (0, 2, 3, 1)).reshape(G, 9 * C4).astype(jnp.bfloat16)
    cb2c = cb2.reshape(G, 1)
    del cb1  # exactly cancelled by training-mode BN2 mean subtraction

    vmem = pl.BlockSpec(memory_space=pltpu.MemorySpace.VMEM)
    out = pl.pallas_call(
        functools.partial(dense_layer_kernel, H=H, W=W,
                          roll_like_numpy=roll_like_numpy),
        out_shape=jax.ShapeDtypeStruct((N, G, HW), jnp.float32),
        in_specs=[vmem] * 8,
        out_specs=vmem,
    )(x_r, g1c, be1c, w1b, g2c, be2c, w2b, cb2c)

    return out.reshape(N, G, H, W)


def reference_forward(x, g1, be1, w1, cb1, g2, be2, w2, cb2):
    """Pure-JAX reference matching PyTorch DenseLayer.forward (training-mode BN)."""
    def bn(y, gamma, beta):
        mu = jnp.mean(y, axis=(0, 2, 3), keepdims=True)
        var = jnp.mean((y - mu) ** 2, axis=(0, 2, 3), keepdims=True)
        yh = (y - mu) * lax.rsqrt(var + BN_EPS)
        return yh * gamma.reshape(1, -1, 1, 1) + beta.reshape(1, -1, 1, 1)

    y = jnp.maximum(bn(x, g1, be1), 0.0)
    y = lax.conv_general_dilated(y, w1, (1, 1), 'VALID',
                                 dimension_numbers=('NCHW', 'OIHW', 'NCHW'))
    y = y + cb1.reshape(1, -1, 1, 1)
    y = jnp.maximum(bn(y, g2, be2), 0.0)
    y = lax.conv_general_dilated(y, w2, (1, 1), ((1, 1), (1, 1)),
                                 dimension_numbers=('NCHW', 'OIHW', 'NCHW'))
    return y + cb2.reshape(1, -1, 1, 1)


if __name__ == "__main__":
    # DenseLayer(n=4, growth_rate=8): Cin = 32, C4 = 32, G = 8
    n, growth_rate = 4, 8
    Cin = growth_rate * n
    C4 = growth_rate * 4
    G = growth_rate
    N, H, W = 2, 16, 16

    key = jax.random.PRNGKey(0)
    ks = jax.random.split(key, 9)

    x = jax.random.normal(ks[0], (N, Cin, H, W), dtype=jnp.float32)

    # Deterministic synthetic parameters, PyTorch-native shapes.
    g1 = jax.random.normal(ks[1], (Cin,), dtype=jnp.float32) * 0.1 + 1.0              # bn1.weight
    be1 = jax.random.normal(ks[2], (Cin,), dtype=jnp.float32) * 0.1                   # bn1.bias
    w1 = jax.random.normal(ks[3], (C4, Cin, 1, 1), dtype=jnp.float32) / Cin ** 0.5    # conv1.weight
    cb1 = jax.random.normal(ks[4], (C4,), dtype=jnp.float32) * 0.05                   # conv1.bias
    g2 = jax.random.normal(ks[5], (C4,), dtype=jnp.float32) * 0.1 + 1.0               # bn2.weight
    be2 = jax.random.normal(ks[6], (C4,), dtype=jnp.float32) * 0.1                    # bn2.bias
    w2 = jax.random.normal(ks[7], (G, C4, 3, 3), dtype=jnp.float32) / (9 * C4) ** 0.5  # conv2.weight
    cb2 = jax.random.normal(ks[8], (G,), dtype=jnp.float32) * 0.05                    # conv2.bias

    roll_like_numpy = _pltpu_roll_matches_numpy()

    out = dense_layer_forward(x, g1, be1, w1, cb1, g2, be2, w2, cb2,
                              roll_like_numpy=roll_like_numpy)
    out = jax.block_until_ready(out)

    ref = reference_forward(x, g1, be1, w1, cb1, g2, be2, w2, cb2)
    assert out.shape == (N, G, H, W), out.shape
    max_err = float(jnp.max(jnp.abs(out - ref)))
    # bf16 MXU operands (f32 accumulate) => slightly looser tolerance than all-f32.
    assert jnp.allclose(out, ref, rtol=2e-2, atol=2e-2), max_err

    print("KERNEL_OK")
</pallas_src>

<mosaic_0001>
module attributes {stable_mosaic.version = 11 : i64} {
  func.func @k(%arg0: memref<8x128xf32, #tpu.memory_space<vmem>>, %arg1: memref<8x128xf32, #tpu.memory_space<vmem>>) attributes {dimension_semantics = [], scalar_prefetch = 0 : i64, scratch_operands = 0 : i64, tpu.core_type = #tpu.core_type<tc>} {
    %c0 = arith.constant 0 : index
    %c0_0 = arith.constant 0 : index
    %0 = vector.load %arg0[%c0, %c0_0] : memref<8x128xf32, #tpu.memory_space<vmem>>, vector<8x128xf32>
    %c1_i32 = arith.constant 1 : i32
    %1 = tpu.dynamic_rotate %0 by %c1_i32 dim 1 : vector<8x128xf32>, i32 -> vector<8x128xf32>
    %c0_1 = arith.constant 0 : index
    %c0_2 = arith.constant 0 : index
    %2 = vector.load %arg1[%c0_1, %c0_2] : memref<8x128xf32, #tpu.memory_space<vmem>>, vector<8x128xf32>
    tpu.vector_store %arg1[%c0_1, %c0_2], %1 {strides = array<i32>} : memref<8x128xf32, #tpu.memory_space<vmem>>, vector<8x128xf32>,
    return
  }
}

</mosaic_0001>

<llo_original>
// kernel: tpu_custom_call.1
$region0: #{tpu_custom_call.1}
  #allocation0 [shape = 'u32[]', space=smem, size = 0x4, offset = 0x4, fixed_abs, tag = 'smem constant byte address 0x4 - core index']
  #allocation1 [shape = 'u32[144,128]{1,0:T(1,128)}', space=vmem, size = 0x12000, scoped, tag = 'internal scratch']
  %s0 = inlined_call_operand.hbm [shape: f32[8,128], index: 0, kind: input, shape index: {}]
  %s1 = inlined_call_operand.hbm [shape: f32[8,128], index: 1, kind: output, shape index: {}]
  %s2 = sld [smem:[#allocation0]]
  $region18: #{tpu_custom_call.1} parent=0
    _
  %s4 = ssub.s32 1, %s2
  %s5 = scalar_select 0, %s4, %s2
  $region1: #{tpu_custom_call.1} parent=0
    #allocation2 [shape = 'u8[4096]{0}', space=vmem, size = 0x1000, scoped, tag = 'input window, operand 0, single buffered']
    #allocation3 [shape = 's32[1]{0}', space=sflag, size = 0x4, scoped, tag = 'scoped memory for tpu_custom_call.1']
    #allocation4 [shape = 's32[1]{0}', space=sflag, size = 0x4, scoped, tag = 'scoped memory for tpu_custom_call.1']
    #allocation5 [shape = 'u8[4096]{0}', space=vmem, size = 0x1000, scoped, tag = 'output window, operand 0, single buffered']
    %6 = vsyncpa [#allocation3], 0
    %7 = vsyncpa [#allocation4], 0
    // Predicated region
    $region2: #{tpu_custom_call.1} parent=1 // pred_check
      _
    $region3: #{tpu_custom_call.1} parent=1 // pred_check_branch
      %9 = sbr.rel (0) target = $region5
    $region4: #{tpu_custom_call.1} parent=1 // pred_region
      %s11 = ssub.s32 128, 128
      %12 = vsyncadd [#allocation3], %s11
      %s14 = sshll.u32 [#allocation2], 4
      %s15 = int_to_ptr.vmem [resolvable:$true] %s14
      %17 = dma.hbm_to_vmem [thread:$0]  %s0, 128, %s15, [#allocation3]
    $region5: #{tpu_custom_call.1} parent=1 // pred_fallthru
      _
    // Predicated region
    $region6: #{tpu_custom_call.1} parent=1 // pred_check
      _
    $region7: #{tpu_custom_call.1} parent=1 // pred_check_branch
      %19 = sbr.rel (0) target = $region9
    $region8: #{tpu_custom_call.1} parent=1 // pred_region
      %20 = dma.done [#allocation3], 128
    $region9: #{tpu_custom_call.1} parent=1 // pred_fallthru
      _
    %v21 = vld [vmem:[#allocation2] sm:$0xff]
    %22 = vrot.lane.b32.xlu0 %v21, 1
    %v23 = vpop.permute.xlu0 %22
    %24 = vst [vmem:[#allocation5] sm:$0xff] %v23
    // Predicated region
    $region10: #{tpu_custom_call.1} parent=1 // pred_check
      _
    $region11: #{tpu_custom_call.1} parent=1 // pred_check_branch
      %26 = sbr.rel (0) target = $region13
    $region12: #{tpu_custom_call.1} parent=1 // pred_region
      %s28 = ssub.s32 128, 128
      %29 = vsyncadd [#allocation4], %s28
      %s31 = sshll.u32 [#allocation5], 4
      %s32 = int_to_ptr.vmem [resolvable:$true] %s31
      %34 = dma.vmem_to_hbm [thread:$0]  %s32, 128, %s1, [#allocation4]
    $region13: #{tpu_custom_call.1} parent=1 // pred_fallthru
      _
    // Predicated region
    $region14: #{tpu_custom_call.1} parent=1 // pred_check
      _
    $region15: #{tpu_custom_call.1} parent=1 // pred_check_branch
      %36 = sbr.rel (0) target = $region17
    $region16: #{tpu_custom_call.1} parent=1 // pred_region
      %37 = dma.done [#allocation4], 128
    $region17: #{tpu_custom_call.1} parent=1 // pred_fallthru
      _
    %38 = vsyncpa [#allocation3], 1
    %39 = vsyncpa [#allocation4], 1

</llo_original>
